<compile_context>
chip_gen: v5e
topology: v5e:2x2
jax: 0.10.0
libtpu: 0.0.40
codegen_flags: <defaults>
</compile_context>

<pallas_src>
import math

import numpy as np
import jax
import jax.numpy as jnp
from jax.experimental import pallas as pl
from jax.experimental.pallas import tpu as pltpu


def _kernel_lane_dense_batch(time_ref, table_ref, out_ref):
    # Transposed layout: time_ref (1, TB), table_ref (dim, 2), out_ref (dim, TB).
    # Batch lives on the 128-wide lane axis -> unmasked full-width stores.
    t = time_ref[...]             # (1, TB)  -> stride-0 sublane broadcast
    freqs = table_ref[:, 0:1]     # (dim, 1) frequency column (half-dim tiled x2)
    phase = table_ref[:, 1:2]     # (dim, 1) 0 (sin half) / pi/2 (cos half)
    out_ref[...] = jnp.sin(t * freqs + phase)   # cos(x) == sin(x + pi/2)


def _kernel_lane_dense_dim(time_ref, table_ref, out_ref):
    # Natural layout (dim % 128 == 0): time_ref (TB, 1), table_ref (2, dim),
    # out_ref (TB, dim).  The (TB, 1) time block is lane-padded in VMEM; that
    # is acceptable here because dim >= 128 makes it a tiny fraction of traffic.
    t = time_ref[...]              # (TB, 1)
    freqs = table_ref[0:1, :]      # (1, dim)
    phase = table_ref[1:2, :]      # (1, dim)
    out_ref[...] = jnp.sin(t * freqs + phase)


def _round_up(x, m):
    return ((x + m - 1) // m) * m


def _choose_tile(B, dim, align, budget_bytes):
    """Batch-axis tile: multiple of `align`, VMEM-budgeted (double-buffered),
    and capped to give >= 2 grid steps when B allows (v7x megacore)."""
    if B <= align:
        return B                                    # single full-extent block
    bytes_per_b = 2 * 4 * (dim + 128)               # dbl-buffered out + padded time
    tb = max(align, min(B, budget_bytes // bytes_per_b))
    tb = min(tb, _round_up(pl.cdiv(B, 2), align))   # >= 2 grid steps
    return (tb // align) * align


def sinusoidal_position_embeddings(time, dim, scaling_factor, *,
                                   vmem_block_budget_bytes=8 << 20):
    """time: (B,) float array -> (B, dim) float32 embeddings [sin(t*f) || cos(t*f)]."""
    assert dim % 2 == 0, "dim must be even (sin/cos halves)"
    half_dim = dim // 2
    assert half_dim >= 2, "dim must be >= 4 (half_dim - 1 is a denominator)"
    B = time.shape[0]

    # Hoisted, static frequency/phase table — numpy so it is a trace-time constant.
    coef = math.log(scaling_factor) / (half_dim - 1)
    freqs = np.exp(np.arange(half_dim, dtype=np.float32) * np.float32(-coef))
    freqs_full = np.concatenate([freqs, freqs]).astype(np.float32)          # (dim,)
    phase = np.concatenate([np.zeros(half_dim, np.float32),
                            np.full(half_dim, math.pi / 2, np.float32)])    # (dim,)

    if dim % 128 == 0:
        # Output (B, dim) is already lane-dense: store it directly.
        table = np.stack([freqs_full, phase], axis=0)                       # (2, dim)
        time_col = time.reshape(B, 1).astype(jnp.float32)
        tb = _choose_tile(B, dim, 8, vmem_block_budget_bytes)
        return pl.pallas_call(
            _kernel_lane_dense_dim,
            out_shape=jax.ShapeDtypeStruct((B, dim), jnp.float32),
            grid=(pl.cdiv(B, tb),),
            in_specs=[
                pl.BlockSpec((tb, 1), lambda i: (i, 0)),     # per-block time column
                pl.BlockSpec((2, dim), lambda i: (0, 0)),    # shared freq/phase table
            ],
            out_specs=pl.BlockSpec((tb, dim), lambda i: (i, 0)),
            compiler_params=pltpu.CompilerParams(
                dimension_semantics=("parallel",)),
        )(time_col, table)

    # dim not a multiple of 128 (e.g. dim < 128): compute transposed (dim, B)
    # so the stored last axis (batch) is lane-dense, transpose back outside.
    tableT = np.stack([freqs_full, phase], axis=1)                          # (dim, 2)
    time_row = time.reshape(1, B).astype(jnp.float32)
    tb = _choose_tile(B, dim, 128, vmem_block_budget_bytes)
    outT = pl.pallas_call(
        _kernel_lane_dense_batch,
        out_shape=jax.ShapeDtypeStruct((dim, B), jnp.float32),
        grid=(pl.cdiv(B, tb),),
        in_specs=[
            pl.BlockSpec((1, tb), lambda i: (0, i)),         # lane-dense time row
            pl.BlockSpec((dim, 2), lambda i: (0, 0)),        # shared freq/phase table
        ],
        out_specs=pl.BlockSpec((dim, tb), lambda i: (0, i)),
        compiler_params=pltpu.CompilerParams(
            dimension_semantics=("parallel",)),
    )(time_row, tableT)
    return outT.T   # layout plumbing back to the module's (B, dim) contract


def _reference(time, dim, scaling_factor):
    half_dim = dim // 2
    coef = math.log(scaling_factor) / (half_dim - 1)
    freqs = jnp.exp(jnp.arange(half_dim, dtype=jnp.float32) * -coef)
    args = time.astype(jnp.float32)[:, None] * freqs[None, :]
    return jnp.concatenate([jnp.sin(args), jnp.cos(args)], axis=-1)


if __name__ == "__main__":
    B, DIM, SCALE = 8, 32, 10000.0

    key = jax.random.PRNGKey(0)
    # Diffusion timesteps: integer-valued floats in [0, 1000).
    time = jax.random.randint(key, (B,), 0, 1000).astype(jnp.float32)

    out = jax.block_until_ready(sinusoidal_position_embeddings(time, DIM, SCALE))
    ref = _reference(time, DIM, SCALE)
    assert out.shape == (B, DIM)
    assert out.dtype == jnp.float32
    # sin/cos arguments reach ~1e3 rad; f32 range-reduction differences between
    # the in-kernel sin and XLA's sin/cos show up at the ~1e-4 level, so use a
    # tolerance consistent with that (still catches structural errors).
    err = float(jnp.max(jnp.abs(out - ref)))
    assert jnp.allclose(out, ref, atol=1e-3, rtol=1e-3), err

    # Also exercise the dim % 128 == 0 (direct lane-dense, multi-step grid) path.
    B2, DIM2 = 16, 128
    time2 = jax.random.randint(jax.random.PRNGKey(1), (B2,), 0, 1000).astype(jnp.float32)
    out2 = jax.block_until_ready(sinusoidal_position_embeddings(time2, DIM2, SCALE))
    ref2 = _reference(time2, DIM2, SCALE)
    assert out2.shape == (B2, DIM2)
    err2 = float(jnp.max(jnp.abs(out2 - ref2)))
    assert jnp.allclose(out2, ref2, atol=1e-3, rtol=1e-3), err2

    print("KERNEL_OK")
</pallas_src>

<mosaic_0001>
module attributes {stable_mosaic.version = 11 : i64} {
  func.func @_kernel_lane_dense_batch(%arg0: i32, %arg1: memref<1x8xf32, #tpu.memory_space<vmem>>, %arg2: memref<32x2xf32, #tpu.memory_space<vmem>>, %arg3: memref<32x8xf32, #tpu.memory_space<vmem>>) attributes {dimension_semantics = [#tpu.dimension_semantics<parallel>], iteration_bounds = array<i64: 1>, scalar_prefetch = 0 : i64, scratch_operands = 0 : i64, tpu.core_type = #tpu.core_type<tc>, window_params = [{transform_indices = @transform_0, window_bounds = array<i64: 1, 8>}, {pipeline_mode = #tpu.pipeline_mode<synchronous>, transform_indices = @transform_1, window_bounds = array<i64: 32, 2>}, {transform_indices = @transform_2, window_bounds = array<i64: 32, 8>}]} {
    %c0 = arith.constant 0 : index
    %c0_0 = arith.constant 0 : index
    %0 = vector.load %arg1[%c0, %c0_0] : memref<1x8xf32, #tpu.memory_space<vmem>>, vector<1x8xf32>
    %c0_1 = arith.constant 0 : index
    %c0_2 = arith.constant 0 : index
    %1 = vector.load %arg2[%c0_1, %c0_2] : memref<32x2xf32, #tpu.memory_space<vmem>>, vector<32x1xf32>
    %c0_3 = arith.constant 0 : index
    %c1 = arith.constant 1 : index
    %2 = vector.load %arg2[%c0_3, %c1] : memref<32x2xf32, #tpu.memory_space<vmem>>, vector<32x1xf32>
    %3 = vector.broadcast %0 : vector<1x8xf32> to vector<32x8xf32>
    %4 = vector.broadcast %1 : vector<32x1xf32> to vector<32x8xf32>
    %5 = arith.mulf %3, %4 : vector<32x8xf32>
    %6 = vector.broadcast %2 : vector<32x1xf32> to vector<32x8xf32>
    %7 = arith.addf %5, %6 : vector<32x8xf32>
    %8 = math.sin %7 : vector<32x8xf32>
    %c0_4 = arith.constant 0 : index
    %c0_5 = arith.constant 0 : index
    %9 = vector.load %arg3[%c0_4, %c0_5] : memref<32x8xf32, #tpu.memory_space<vmem>>, vector<32x8xf32>
    tpu.vector_store %arg3[%c0_4, %c0_5], %8 {strides = array<i32>} : memref<32x8xf32, #tpu.memory_space<vmem>>, vector<32x8xf32>,
    return
  }
  func.func @transform_0(%arg0: i32) -> (i32, i32) {
    %c0_i32 = arith.constant 0 : i32
    %c0_i32_0 = arith.constant 0 : i32
    return %c0_i32, %arg0 : i32, i32
  }
  func.func @transform_1(%arg0: i32) -> (i32, i32) {
    %c0_i32 = arith.constant 0 : i32
    %c0_i32_0 = arith.constant 0 : i32
    %c0_i32_1 = arith.constant 0 : i32
    return %c0_i32, %c0_i32_0 : i32, i32
  }
  func.func @transform_2(%arg0: i32) -> (i32, i32) {
    %c0_i32 = arith.constant 0 : i32
    %c0_i32_0 = arith.constant 0 : i32
    return %c0_i32, %arg0 : i32, i32
  }
}

</mosaic_0001>

<llo_original>
// kernel: tpu_custom_call.1
$region0: #{tpu_custom_call.1}
  #allocation0 [shape = 'u32[]', space=smem, size = 0x4, offset = 0x4, fixed_abs, tag = 'smem constant byte address 0x4 - core index']
  #allocation1 [shape = 'u32[72,128]{1,0:T(1,128)}', space=vmem, size = 0x9000, scoped, tag = 'internal scratch']
  %s0 = inlined_call_operand.vmem [shape: f32[1,8], index: 0, kind: input, shape index: {}]
  %s1 = inlined_call_operand.vmem [shape: f32[32,2], index: 1, kind: input, shape index: {}]
  %s2 = inlined_call_operand.vmem [shape: f32[32,8], index: 2, kind: output, shape index: {}]
  %s3 = sld [smem:[#allocation0]]
  $region18: #{tpu_custom_call.1} parent=0
    _
  %s5 = ssub.s32 1, %s3
  %s6 = scalar_select 0, %s5, %s3
  // Predicated region
  $region2: #{tpu_custom_call.1} parent=0 // pred_check
    _
  $region3: #{tpu_custom_call.1} parent=0 // pred_check_branch
    %8 = sbr.rel (0) target = $region5
  $region4: #{tpu_custom_call.1} parent=0 // pred_region
    _
  $region5: #{tpu_custom_call.1} parent=0 // pred_fallthru
    _
  // Predicated region
  $region6: #{tpu_custom_call.1} parent=0 // pred_check
    _
  $region7: #{tpu_custom_call.1} parent=0 // pred_check_branch
    %10 = sbr.rel (0) target = $region9
  $region8: #{tpu_custom_call.1} parent=0 // pred_region
    _
  $region9: #{tpu_custom_call.1} parent=0 // pred_fallthru
    _
  %v11 = vld [vmem:[%s0] sm:$0x1]
  %v12 = vld [vmem:[%s1] sm:$0xff]
  %v13 = vld [vmem:[%s1 + $0x8] sm:$0xff]
  %v14 = vld [vmem:[%s1 + $0x10] sm:$0xff]
  %v15 = vld [vmem:[%s1 + $0x18] sm:$0xff]
  %v17 = vperm.slane %v11, 0
  %20 = vset.pattern.permute.xlu0 0
  %21 = vperm.xlu0 %20, %v12
  %v22 = vpop.permute.xlu0 %21
  %25 = vset.pattern.permute.xlu0 0
  %26 = vperm.xlu0 %25, %v13
  %v27 = vpop.permute.xlu0 %26
  %30 = vset.pattern.permute.xlu0 0
  %31 = vperm.xlu0 %30, %v14
  %v32 = vpop.permute.xlu0 %31
  %35 = vset.pattern.permute.xlu0 0
  %36 = vperm.xlu0 %35, %v15
  %v37 = vpop.permute.xlu0 %36
  %v39 = vmul.f32 %v17, %v22
  %v40 = vmul.f32 %v17, %v27
  %v41 = vmul.f32 %v17, %v32
  %v42 = vmul.f32 %v17, %v37
  %43 = vset.pattern.permute.xlu0 1
  %44 = vperm.xlu0 %43, %v12
  %v45 = vpop.permute.xlu0 %44
  %47 = vset.pattern.permute.xlu0 1
  %48 = vperm.xlu0 %47, %v13
  %v49 = vpop.permute.xlu0 %48
  %51 = vset.pattern.permute.xlu0 1
  %52 = vperm.xlu0 %51, %v14
  %v53 = vpop.permute.xlu0 %52
  %55 = vset.pattern.permute.xlu0 1
  %56 = vperm.xlu0 %55, %v15
  %v57 = vpop.permute.xlu0 %56
  %v59 = vadd.f32 %v39, %v45
  %v60 = vadd.f32 %v40, %v49
  %v61 = vadd.f32 %v41, %v53
  %v62 = vadd.f32 %v42, %v57
  %v63 = vand.u32 2147483647, %v59
  %vm64 = vcmp.le.f32.partialorder %v63, 0.7853982
  %vm65 = vcmp.lt.s32.totalorder %v59, 0
  %v66 = vand.u32 %v59, 2139095040
  %v67 = vshrl.u32 %v66, 23
  %v68 = vsub.s32 %v67, 127
  %v69 = vand.u32 2147483647, %v59
  %v70 = vand.u32 %v69, 8388607
  %v71 = vor.u32 %v70, 8388608
  %v72 = vsub.s32 0, %v71
  %v73 = vadd.s32 %v68, 1
  %vm74 = vcmp.gt.s32.totalorder %v73, 0
  %v75 = vsel %vm74, %v73, 0
  %v76 = vshrl.u32 %v75, 5
  %v77 = vand.u32 %v75, 31
  %v78 = vsub.s32 32, %v77
  %v79 = vshrl.u32 683565275, %v78
  %v80 = vshll.u32 683565275, %v77
  %v81 = vshrl.u32 2475754826, %v78
  %v82 = vor.u32 %v80, %v81
  %v83 = vshll.u32 2475754826, %v77
  %v84 = vshrl.u32 2131351028, %v78
  %v85 = vor.u32 %v83, %v84
  %v86 = vshll.u32 2131351028, %v77
  %v87 = vshrl.u32 2102212464, %v78
  %v88 = vor.u32 %v86, %v87
  %v89 = vshll.u32 2102212464, %v77
  %v90 = vshrl.u32 920167782, %v78
  %v91 = vor.u32 %v89, %v90
  %v92 = vshll.u32 920167782, %v77
  %v93 = vshrl.u32 1326507024, %v78
  %v94 = vor.u32 %v92, %v93
  %vm95 = vcmp.lt.s32.totalorder %v76, 1
  %vm96 = vcmp.lt.s32.totalorder %v76, 2
  %vm97 = vcmp.lt.s32.totalorder %v76, 3
  %vm98 = vcmp.lt.s32.totalorder %v76, 4
  %v99 = vsel %vm95, %v79, %v82
  %v100 = vsel %vm98, %v88, 2102212464
  %v101 = vsel %vm97, %v85, %v100
  %v102 = vsel %vm96, %v99, %v101
  %v103 = vsel %vm95, %v82, %v85
  %v104 = vsel %vm98, %v91, 920167782
  %v105 = vsel %vm97, %v88, %v104
  %v106 = vsel %vm96, %v103, %v105
  %v107 = vsel %vm95, %v85, %v88
  %v108 = vsel %vm98, %v94, 1326507024
  %v109 = vsel %vm97, %v91, %v108
  %v110 = vsel %vm96, %v107, %v109
  %v111 = vshll.u32 %v71, 8
  %v112 = vand.u32 %v111, 65535
  %v113 = vshrl.u32 %v111, 16
  %v114 = vand.u32 %v110, 65535
  %v115 = vshrl.u32 %v110, 16
  %v116 = vmul.u32 %v112, %v114
  %v117 = vmul.u32 %v112, %v115
  %v118 = vmul.u32 %v113, %v114
  %v119 = vmul.u32 %v113, %v115
  %v120 = vshll.u32 %v117, 16
  %v121 = vshrl.u32 %v117, 16
  %v122 = vshll.u32 %v118, 16
  %v123 = vshrl.u32 %v118, 16
  %vm124 = vc.u32 %v116, %v120
  %v125 = vsel %vm124, 1, 0
  %v126 = vadd.s32 %v116, %v120
  %v127 = vadd.s32 %v119, %v125
  %vm128 = vc.u32 %v126, %v122
  %v129 = vsel %vm128, 1, 0
  %v130 = vadd.s32 %v126, %v122
  %v131 = vadd.s32 %v127, %v129
  %v132 = vadd.s32 %v131, %v121
  %v133 = vadd.s32 %v132, %v123
  %v134 = vand.u32 %v111, 65535
  %v135 = vshrl.u32 %v111, 16
  %v136 = vand.u32 %v106, 65535
  %v137 = vshrl.u32 %v106, 16
  %v138 = vmul.u32 %v134, %v136
  %v139 = vmul.u32 %v134, %v137
  %v140 = vmul.u32 %v135, %v136
  %v141 = vmul.u32 %v135, %v137
  %v142 = vshll.u32 %v139, 16
  %v143 = vshrl.u32 %v139, 16
  %v144 = vshll.u32 %v140, 16
  %v145 = vshrl.u32 %v140, 16
  %vm146 = vc.u32 %v138, %v142
  %v147 = vsel %vm146, 1, 0
  %v148 = vadd.s32 %v138, %v142
  %v149 = vadd.s32 %v141, %v147
  %vm150 = vc.u32 %v148, %v144
  %v151 = vsel %vm150, 1, 0
  %v152 = vadd.s32 %v148, %v144
  %v153 = vadd.s32 %v149, %v151
  %v154 = vadd.s32 %v153, %v143
  %v155 = vadd.s32 %v154, %v145
  %v156 = vmul.u32 %v111, %v102
  %v157 = vadd.s32 %v133, %v152
  %vm158 = vc.u32 %v133, %v152
  %v159 = vadd.s32 %v155, 1
  %v160 = vsel %vm158, %v159, %v155
  %v161 = vadd.s32 %v156, %v160
  %v162 = vadd.s32 %v161, 536870912
  %v163 = vshrl.u32 %v162, 30
  %v164 = vshll.u32 %v163, 30
  %v165 = vsub.s32 %v161, %v164
  %vm166 = vcmp.lt.s32.totalorder %v165, 0
  %v167 = vsub.s32 0, %v165
  %v168 = vsel %vm166, %v167, %v165
  %v169 = vclz %v168
  %v170 = vsub.s32 %v169, 2
  %vm171 = vcmp.gt.s32.totalorder 0, %v170
  %v172 = vsel %vm171, 0, %v170
  %v173 = vsub.s32 32, %v172
  %v174 = vshll.u32 %v165, %v172
  %v175 = vshrl.u32 %v157, %v173
  %v176 = vor.u32 %v174, %v175
  %v177 = vsub.s32 4294967266, %v172
  %v178 = vadd.s32 %v177, 127
  %v179 = vshll.u32 %v178, 23
  %v180 = vor.u32 4788187, %v179
  %v181 = vand.u32 2147483647, %v180
  %v183 = vcvt.s32.f32 %v176
  %v184 = vmul.f32 %v183, %v181
  %v185 = vxor.u32 %v184, 2147483648
  %v186 = vsel %vm65, %v185, %v184
  %v187 = vsub.s32 4, %v163
  %v188 = vsel %vm65, %v187, %v163
  %v189 = vsel %vm64, %v59, %v186
  %v190 = vsel %vm64, 0, %v188
  %v191 = vmul.f32 %v189, %v189
  %v192 = vmul.f32 %v191, -0.001358992
  %v193 = vadd.f32 %v192, 0.041655596
  %v194 = vmul.f32 %v191, %v193
  %v195 = vadd.f32 %v194, -0.4999988
  %v196 = vmul.f32 %v191, %v195
  %v197 = vadd.f32 1.0, %v196
  %v198 = vmul.f32 %v189, %v189
  %v199 = vmul.f32 %v198, -0.00019511016
  %v200 = vadd.f32 %v199, 0.008332121
  %v201 = vmul.f32 %v198, %v200
  %v202 = vadd.f32 %v201, -0.16666654
  %v203 = vmul.f32 %v198, %v202
  %v204 = vadd.f32 %v203, 1.0
  %v205 = vmul.f32 %v204, %v189
  %vm206 = vweird.f32 %v59
  %v207 = vadd.s32 %v190, 3
  %v208 = vand.u32 %v207, 3
  %vm209 = vcmp.lt.s32.totalorder %v208, 2
  %vm210 = vcmp.eq.s32.totalorder %v208, 0
  %v211 = vxor.u32 %v205, 2147483648
  %v212 = vsel %vm210, %v197, %v211
  %vm213 = vcmp.eq.s32.totalorder %v208, 2
  %v214 = vxor.u32 %v197, 2147483648
  %v215 = vsel %vm213, %v214, %v205
  %v216 = vsel %vm209, %v212, %v215
  %v217 = vsel %vm206, nan, %v216
  %v218 = vand.u32 2147483647, %v60
  %vm219 = vcmp.le.f32.partialorder %v218, 0.7853982
  %vm220 = vcmp.lt.s32.totalorder %v60, 0
  %v221 = vand.u32 %v60, 2139095040
  %v222 = vshrl.u32 %v221, 23
  %v223 = vsub.s32 %v222, 127
  %v224 = vand.u32 2147483647, %v60
  %v225 = vand.u32 %v224, 8388607
  %v226 = vor.u32 %v225, 8388608
  %v227 = vsub.s32 0, %v226
  %v228 = vadd.s32 %v223, 1
  %vm229 = vcmp.gt.s32.totalorder %v228, 0
  %v230 = vsel %vm229, %v228, 0
  %v231 = vshrl.u32 %v230, 5
  %v232 = vand.u32 %v230, 31
  %v233 = vsub.s32 32, %v232
  %v234 = vshrl.u32 683565275, %v233
  %v235 = vshll.u32 683565275, %v232
  %v236 = vshrl.u32 2475754826, %v233
  %v237 = vor.u32 %v235, %v236
  %v238 = vshll.u32 2475754826, %v232
  %v239 = vshrl.u32 2131351028, %v233
  %v240 = vor.u32 %v238, %v239
  %v241 = vshll.u32 2131351028, %v232
  %v242 = vshrl.u32 2102212464, %v233
  %v243 = vor.u32 %v241, %v242
  %v244 = vshll.u32 2102212464, %v232
  %v245 = vshrl.u32 920167782, %v233
  %v246 = vor.u32 %v244, %v245
  %v247 = vshll.u32 920167782, %v232
  %v248 = vshrl.u32 1326507024, %v233
  %v249 = vor.u32 %v247, %v248
  %vm250 = vcmp.lt.s32.totalorder %v231, 1
  %vm251 = vcmp.lt.s32.totalorder %v231, 2
  %vm252 = vcmp.lt.s32.totalorder %v231, 3
  %vm253 = vcmp.lt.s32.totalorder %v231, 4
  %v254 = vsel %vm250, %v234, %v237
  %v255 = vsel %vm253, %v243, 2102212464
  %v256 = vsel %vm252, %v240, %v255
  %v257 = vsel %vm251, %v254, %v256
  %v258 = vsel %vm250, %v237, %v240
  %v259 = vsel %vm253, %v246, 920167782
  %v260 = vsel %vm252, %v243, %v259
  %v261 = vsel %vm251, %v258, %v260
  %v262 = vsel %vm250, %v240, %v243
  %v263 = vsel %vm253, %v249, 1326507024
  %v264 = vsel %vm252, %v246, %v263
  %v265 = vsel %vm251, %v262, %v264
  %v266 = vshll.u32 %v226, 8
  %v267 = vand.u32 %v266, 65535
  %v268 = vshrl.u32 %v266, 16
  %v269 = vand.u32 %v265, 65535
  %v270 = vshrl.u32 %v265, 16
  %v271 = vmul.u32 %v267, %v269
  %v272 = vmul.u32 %v267, %v270
  %v273 = vmul.u32 %v268, %v269
  %v274 = vmul.u32 %v268, %v270
  %v275 = vshll.u32 %v272, 16
  %v276 = vshrl.u32 %v272, 16
  %v277 = vshll.u32 %v273, 16
  %v278 = vshrl.u32 %v273, 16
  %vm279 = vc.u32 %v271, %v275
  %v280 = vsel %vm279, 1, 0
  %v281 = vadd.s32 %v271, %v275
  %v282 = vadd.s32 %v274, %v280
  %vm283 = vc.u32 %v281, %v277
  %v284 = vsel %vm283, 1, 0
  %v285 = vadd.s32 %v281, %v277
  %v286 = vadd.s32 %v282, %v284
  %v287 = vadd.s32 %v286, %v276
  %v288 = vadd.s32 %v287, %v278
  %v289 = vand.u32 %v266, 65535
  %v290 = vshrl.u32 %v266, 16
  %v291 = vand.u32 %v261, 65535
  %v292 = vshrl.u32 %v261, 16
  %v293 = vmul.u32 %v289, %v291
  %v294 = vmul.u32 %v289, %v292
  %v295 = vmul.u32 %v290, %v291
  %v296 = vmul.u32 %v290, %v292
  %v297 = vshll.u32 %v294, 16
  %v298 = vshrl.u32 %v294, 16
  %v299 = vshll.u32 %v295, 16
  %v300 = vshrl.u32 %v295, 16
  %vm301 = vc.u32 %v293, %v297
  %v302 = vsel %vm301, 1, 0
  %v303 = vadd.s32 %v293, %v297
  %v304 = vadd.s32 %v296, %v302
  %vm305 = vc.u32 %v303, %v299
  %v306 = vsel %vm305, 1, 0
  %v307 = vadd.s32 %v303, %v299
  %v308 = vadd.s32 %v304, %v306
  %v309 = vadd.s32 %v308, %v298
  %v310 = vadd.s32 %v309, %v300
  %v311 = vmul.u32 %v266, %v257
  %v312 = vadd.s32 %v288, %v307
  %vm313 = vc.u32 %v288, %v307
  %v314 = vadd.s32 %v310, 1
  %v315 = vsel %vm313, %v314, %v310
  %v316 = vadd.s32 %v311, %v315
  %v317 = vadd.s32 %v316, 536870912
  %v318 = vshrl.u32 %v317, 30
  %v319 = vshll.u32 %v318, 30
  %v320 = vsub.s32 %v316, %v319
  %vm321 = vcmp.lt.s32.totalorder %v320, 0
  %v322 = vsub.s32 0, %v320
  %v323 = vsel %vm321, %v322, %v320
  %v324 = vclz %v323
  %v325 = vsub.s32 %v324, 2
  %vm326 = vcmp.gt.s32.totalorder 0, %v325
  %v327 = vsel %vm326, 0, %v325
  %v328 = vsub.s32 32, %v327
  %v329 = vshll.u32 %v320, %v327
  %v330 = vshrl.u32 %v312, %v328
  %v331 = vor.u32 %v329, %v330
  %v332 = vsub.s32 4294967266, %v327
  %v333 = vadd.s32 %v332, 127
  %v334 = vshll.u32 %v333, 23
  %v335 = vor.u32 4788187, %v334
  %v336 = vand.u32 2147483647, %v335
  %v338 = vcvt.s32.f32 %v331
  %v339 = vmul.f32 %v338, %v336
  %v340 = vxor.u32 %v339, 2147483648
  %v341 = vsel %vm220, %v340, %v339
  %v342 = vsub.s32 4, %v318
  %v343 = vsel %vm220, %v342, %v318
  %v344 = vsel %vm219, %v60, %v341
  %v345 = vsel %vm219, 0, %v343
  %v346 = vmul.f32 %v344, %v344
  %v347 = vmul.f32 %v346, -0.001358992
  %v348 = vadd.f32 %v347, 0.041655596
  %v349 = vmul.f32 %v346, %v348
  %v350 = vadd.f32 %v349, -0.4999988
  %v351 = vmul.f32 %v346, %v350
  %v352 = vadd.f32 1.0, %v351
  %v353 = vmul.f32 %v344, %v344
  %v354 = vmul.f32 %v353, -0.00019511016
  %v355 = vadd.f32 %v354, 0.008332121
  %v356 = vmul.f32 %v353, %v355
  %v357 = vadd.f32 %v356, -0.16666654
  %v358 = vmul.f32 %v353, %v357
  %v359 = vadd.f32 %v358, 1.0
  %v360 = vmul.f32 %v359, %v344
  %vm361 = vweird.f32 %v60
  %v362 = vadd.s32 %v345, 3
  %v363 = vand.u32 %v362, 3
  %vm364 = vcmp.lt.s32.totalorder %v363, 2
  %vm365 = vcmp.eq.s32.totalorder %v363, 0
  %v366 = vxor.u32 %v360, 2147483648
  %v367 = vsel %vm365, %v352, %v366
  %vm368 = vcmp.eq.s32.totalorder %v363, 2
  %v369 = vxor.u32 %v352, 2147483648
  %v370 = vsel %vm368, %v369, %v360
  %v371 = vsel %vm364, %v367, %v370
  %v372 = vsel %vm361, nan, %v371
  %v373 = vand.u32 2147483647, %v61
  %vm374 = vcmp.le.f32.partialorder %v373, 0.7853982
  %vm375 = vcmp.lt.s32.totalorder %v61, 0
  %v376 = vand.u32 %v61, 2139095040
  %v377 = vshrl.u32 %v376, 23
  %v378 = vsub.s32 %v377, 127
  %v379 = vand.u32 2147483647, %v61
  %v380 = vand.u32 %v379, 8388607
  %v381 = vor.u32 %v380, 8388608
  %v382 = vsub.s32 0, %v381
  %v383 = vadd.s32 %v378, 1
  %vm384 = vcmp.gt.s32.totalorder %v383, 0
  %v385 = vsel %vm384, %v383, 0
  %v386 = vshrl.u32 %v385, 5
  %v387 = vand.u32 %v385, 31
  %v388 = vsub.s32 32, %v387
  %v389 = vshrl.u32 683565275, %v388
  %v390 = vshll.u32 683565275, %v387
  %v391 = vshrl.u32 2475754826, %v388
  %v392 = vor.u32 %v390, %v391
  %v393 = vshll.u32 2475754826, %v387
  %v394 = vshrl.u32 2131351028, %v388
  %v395 = vor.u32 %v393, %v394
  %v396 = vshll.u32 2131351028, %v387
  %v397 = vshrl.u32 2102212464, %v388
  %v398 = vor.u32 %v396, %v397
  %v399 = vshll.u32 2102212464, %v387
  %v400 = vshrl.u32 920167782, %v388
  %v401 = vor.u32 %v399, %v400
  %v402 = vshll.u32 920167782, %v387
  %v403 = vshrl.u32 1326507024, %v388
  %v404 = vor.u32 %v402, %v403
  %vm405 = vcmp.lt.s32.totalorder %v386, 1
  %vm406 = vcmp.lt.s32.totalorder %v386, 2
  %vm407 = vcmp.lt.s32.totalorder %v386, 3
  %vm408 = vcmp.lt.s32.totalorder %v386, 4
  %v409 = vsel %vm405, %v389, %v392
  %v410 = vsel %vm408, %v398, 2102212464
  %v411 = vsel %vm407, %v395, %v410
  %v412 = vsel %vm406, %v409, %v411
  %v413 = vsel %vm405, %v392, %v395
  %v414 = vsel %vm408, %v401, 920167782
  %v415 = vsel %vm407, %v398, %v414
  %v416 = vsel %vm406, %v413, %v415
  %v417 = vsel %vm405, %v395, %v398
  %v418 = vsel %vm408, %v404, 1326507024
  %v419 = vsel %vm407, %v401, %v418
  %v420 = vsel %vm406, %v417, %v419
  %v421 = vshll.u32 %v381, 8
  %v422 = vand.u32 %v421, 65535
  %v423 = vshrl.u32 %v421, 16
  %v424 = vand.u32 %v420, 65535
  %v425 = vshrl.u32 %v420, 16
  %v426 = vmul.u32 %v422, %v424
  %v427 = vmul.u32 %v422, %v425
  %v428 = vmul.u32 %v423, %v424
  %v429 = vmul.u32 %v423, %v425
  %v430 = vshll.u32 %v427, 16
  %v431 = vshrl.u32 %v427, 16
  %v432 = vshll.u32 %v428, 16
  %v433 = vshrl.u32 %v428, 16
  %vm434 = vc.u32 %v426, %v430
  %v435 = vsel %vm434, 1, 0
  %v436 = vadd.s32 %v426, %v430
  %v437 = vadd.s32 %v429, %v435
  %vm438 = vc.u32 %v436, %v432
  %v439 = vsel %vm438, 1, 0
  %v440 = vadd.s32 %v436, %v432
  %v441 = vadd.s32 %v437, %v439
  %v442 = vadd.s32 %v441, %v431
  %v443 = vadd.s32 %v442, %v433
  %v444 = vand.u32 %v421, 65535
  %v445 = vshrl.u32 %v421, 16
  %v446 = vand.u32 %v416, 65535
  %v447 = vshrl.u32 %v416, 16
  %v448 = vmul.u32 %v444, %v446
  %v449 = vmul.u32 %v444, %v447
  %v450 = vmul.u32 %v445, %v446
  %v451 = vmul.u32 %v445, %v447
  %v452 = vshll.u32 %v449, 16
  %v453 = vshrl.u32 %v449, 16
  %v454 = vshll.u32 %v450, 16
  %v455 = vshrl.u32 %v450, 16
  %vm456 = vc.u32 %v448, %v452
  %v457 = vsel %vm456, 1, 0
  %v458 = vadd.s32 %v448, %v452
  %v459 = vadd.s32 %v451, %v457
  %vm460 = vc.u32 %v458, %v454
  %v461 = vsel %vm460, 1, 0
  %v462 = vadd.s32 %v458, %v454
  %v463 = vadd.s32 %v459, %v461
  %v464 = vadd.s32 %v463, %v453
  %v465 = vadd.s32 %v464, %v455
  %v466 = vmul.u32 %v421, %v412
  %v467 = vadd.s32 %v443, %v462
  %vm468 = vc.u32 %v443, %v462
  %v469 = vadd.s32 %v465, 1
  %v470 = vsel %vm468, %v469, %v465
  %v471 = vadd.s32 %v466, %v470
  %v472 = vadd.s32 %v471, 536870912
  %v473 = vshrl.u32 %v472, 30
  %v474 = vshll.u32 %v473, 30
  %v475 = vsub.s32 %v471, %v474
  %vm476 = vcmp.lt.s32.totalorder %v475, 0
  %v477 = vsub.s32 0, %v475
  %v478 = vsel %vm476, %v477, %v475
  %v479 = vclz %v478
  %v480 = vsub.s32 %v479, 2
  %vm481 = vcmp.gt.s32.totalorder 0, %v480
  %v482 = vsel %vm481, 0, %v480
  %v483 = vsub.s32 32, %v482
  %v484 = vshll.u32 %v475, %v482
  %v485 = vshrl.u32 %v467, %v483
  %v486 = vor.u32 %v484, %v485
  %v487 = vsub.s32 4294967266, %v482
  %v488 = vadd.s32 %v487, 127
  %v489 = vshll.u32 %v488, 23
  %v490 = vor.u32 4788187, %v489
  %v491 = vand.u32 2147483647, %v490
  %v493 = vcvt.s32.f32 %v486
  %v494 = vmul.f32 %v493, %v491
  %v495 = vxor.u32 %v494, 2147483648
  %v496 = vsel %vm375, %v495, %v494
  %v497 = vsub.s32 4, %v473
  %v498 = vsel %vm375, %v497, %v473
  %v499 = vsel %vm374, %v61, %v496
  %v500 = vsel %vm374, 0, %v498
  %v501 = vmul.f32 %v499, %v499
  %v502 = vmul.f32 %v501, -0.001358992
  %v503 = vadd.f32 %v502, 0.041655596
  %v504 = vmul.f32 %v501, %v503
  %v505 = vadd.f32 %v504, -0.4999988
  %v506 = vmul.f32 %v501, %v505
  %v507 = vadd.f32 1.0, %v506
  %v508 = vmul.f32 %v499, %v499
  %v509 = vmul.f32 %v508, -0.00019511016
  %v510 = vadd.f32 %v509, 0.008332121
  %v511 = vmul.f32 %v508, %v510
  %v512 = vadd.f32 %v511, -0.16666654
  %v513 = vmul.f32 %v508, %v512
  %v514 = vadd.f32 %v513, 1.0
  %v515 = vmul.f32 %v514, %v499
  %vm516 = vweird.f32 %v61
  %v517 = vadd.s32 %v500, 3
  %v518 = vand.u32 %v517, 3
  %vm519 = vcmp.lt.s32.totalorder %v518, 2
  %vm520 = vcmp.eq.s32.totalorder %v518, 0
  %v521 = vxor.u32 %v515, 2147483648
  %v522 = vsel %vm520, %v507, %v521
  %vm523 = vcmp.eq.s32.totalorder %v518, 2
  %v524 = vxor.u32 %v507, 2147483648
  %v525 = vsel %vm523, %v524, %v515
  %v526 = vsel %vm519, %v522, %v525
  %v527 = vsel %vm516, nan, %v526
  %v528 = vand.u32 2147483647, %v62
  %vm529 = vcmp.le.f32.partialorder %v528, 0.7853982
  %vm530 = vcmp.lt.s32.totalorder %v62, 0
  %v531 = vand.u32 %v62, 2139095040
  %v532 = vshrl.u32 %v531, 23
  %v533 = vsub.s32 %v532, 127
  %v534 = vand.u32 2147483647, %v62
  %v535 = vand.u32 %v534, 8388607
  %v536 = vor.u32 %v535, 8388608
  %v537 = vsub.s32 0, %v536
  %v538 = vadd.s32 %v533, 1
  %vm539 = vcmp.gt.s32.totalorder %v538, 0
  %v540 = vsel %vm539, %v538, 0
  %v541 = vshrl.u32 %v540, 5
  %v542 = vand.u32 %v540, 31
  %v543 = vsub.s32 32, %v542
  %v544 = vshrl.u32 683565275, %v543
  %v545 = vshll.u32 683565275, %v542
  %v546 = vshrl.u32 2475754826, %v543
  %v547 = vor.u32 %v545, %v546
  %v548 = vshll.u32 2475754826, %v542
  %v549 = vshrl.u32 2131351028, %v543
  %v550 = vor.u32 %v548, %v549
  %v551 = vshll.u32 2131351028, %v542
  %v552 = vshrl.u32 2102212464, %v543
  %v553 = vor.u32 %v551, %v552
  %v554 = vshll.u32 2102212464, %v542
  %v555 = vshrl.u32 920167782, %v543
  %v556 = vor.u32 %v554, %v555
  %v557 = vshll.u32 920167782, %v542
  %v558 = vshrl.u32 1326507024, %v543
  %v559 = vor.u32 %v557, %v558
  %vm560 = vcmp.lt.s32.totalorder %v541, 1
  %vm561 = vcmp.lt.s32.totalorder %v541, 2
  %vm562 = vcmp.lt.s32.totalorder %v541, 3
  %vm563 = vcmp.lt.s32.totalorder %v541, 4
  %v564 = vsel %vm560, %v544, %v547
  %v565 = vsel %vm563, %v553, 2102212464
  %v566 = vsel %vm562, %v550, %v565
  %v567 = vsel %vm561, %v564, %v566
  %v568 = vsel %vm560, %v547, %v550
  %v569 = vsel %vm563, %v556, 920167782
  %v570 = vsel %vm562, %v553, %v569
  %v571 = vsel %vm561, %v568, %v570
  %v572 = vsel %vm560, %v550, %v553
  %v573 = vsel %vm563, %v559, 1326507024
  %v574 = vsel %vm562, %v556, %v573
  %v575 = vsel %vm561, %v572, %v574
  %v576 = vshll.u32 %v536, 8
  %v577 = vand.u32 %v576, 65535
  %v578 = vshrl.u32 %v576, 16
  %v579 = vand.u32 %v575, 65535
  %v580 = vshrl.u32 %v575, 16
  %v581 = vmul.u32 %v577, %v579
  %v582 = vmul.u32 %v577, %v580
  %v583 = vmul.u32 %v578, %v579
  %v584 = vmul.u32 %v578, %v580
  %v585 = vshll.u32 %v582, 16
  %v586 = vshrl.u32 %v582, 16
  %v587 = vshll.u32 %v583, 16
  %v588 = vshrl.u32 %v583, 16
  %vm589 = vc.u32 %v581, %v585
  %v590 = vsel %vm589, 1, 0
  %v591 = vadd.s32 %v581, %v585
  %v592 = vadd.s32 %v584, %v590
  %vm593 = vc.u32 %v591, %v587
  %v594 = vsel %vm593, 1, 0
  %v595 = vadd.s32 %v591, %v587
  %v596 = vadd.s32 %v592, %v594
  %v597 = vadd.s32 %v596, %v586
  %v598 = vadd.s32 %v597, %v588
  %v599 = vand.u32 %v576, 65535
  %v600 = vshrl.u32 %v576, 16
  %v601 = vand.u32 %v571, 65535
  %v602 = vshrl.u32 %v571, 16
  %v603 = vmul.u32 %v599, %v601
  %v604 = vmul.u32 %v599, %v602
  %v605 = vmul.u32 %v600, %v601
  %v606 = vmul.u32 %v600, %v602
  %v607 = vshll.u32 %v604, 16
  %v608 = vshrl.u32 %v604, 16
  %v609 = vshll.u32 %v605, 16
  %v610 = vshrl.u32 %v605, 16
  %vm611 = vc.u32 %v603, %v607
  %v612 = vsel %vm611, 1, 0
  %v613 = vadd.s32 %v603, %v607
  %v614 = vadd.s32 %v606, %v612
  %vm615 = vc.u32 %v613, %v609
  %v616 = vsel %vm615, 1, 0
  %v617 = vadd.s32 %v613, %v609
  %v618 = vadd.s32 %v614, %v616
  %v619 = vadd.s32 %v618, %v608
  %v620 = vadd.s32 %v619, %v610
  %v621 = vmul.u32 %v576, %v567
  %v622 = vadd.s32 %v598, %v617
  %vm623 = vc.u32 %v598, %v617
  %v624 = vadd.s32 %v620, 1
  %v625 = vsel %vm623, %v624, %v620
  %v626 = vadd.s32 %v621, %v625
  %v627 = vadd.s32 %v626, 536870912
  %v628 = vshrl.u32 %v627, 30
  %v629 = vshll.u32 %v628, 30
  %v630 = vsub.s32 %v626, %v629
  %vm631 = vcmp.lt.s32.totalorder %v630, 0
  %v632 = vsub.s32 0, %v630
  %v633 = vsel %vm631, %v632, %v630
  %v634 = vclz %v633
  %v635 = vsub.s32 %v634, 2
  %vm636 = vcmp.gt.s32.totalorder 0, %v635
  %v637 = vsel %vm636, 0, %v635
  %v638 = vsub.s32 32, %v637
  %v639 = vshll.u32 %v630, %v637
  %v640 = vshrl.u32 %v622, %v638
  %v641 = vor.u32 %v639, %v640
  %v642 = vsub.s32 4294967266, %v637
  %v643 = vadd.s32 %v642, 127
  %v644 = vshll.u32 %v643, 23
  %v645 = vor.u32 4788187, %v644
  %v646 = vand.u32 2147483647, %v645
  %v648 = vcvt.s32.f32 %v641
  %v649 = vmul.f32 %v648, %v646
  %v650 = vxor.u32 %v649, 2147483648
  %v651 = vsel %vm530, %v650, %v649
  %v652 = vsub.s32 4, %v628
  %v653 = vsel %vm530, %v652, %v628
  %v654 = vsel %vm529, %v62, %v651
  %v655 = vsel %vm529, 0, %v653
  %v656 = vmul.f32 %v654, %v654
  %v657 = vmul.f32 %v656, -0.001358992
  %v658 = vadd.f32 %v657, 0.041655596
  %v659 = vmul.f32 %v656, %v658
  %v660 = vadd.f32 %v659, -0.4999988
  %v661 = vmul.f32 %v656, %v660
  %v662 = vadd.f32 1.0, %v661
  %v663 = vmul.f32 %v654, %v654
  %v664 = vmul.f32 %v663, -0.00019511016
  %v665 = vadd.f32 %v664, 0.008332121
  %v666 = vmul.f32 %v663, %v665
  %v667 = vadd.f32 %v666, -0.16666654
  %v668 = vmul.f32 %v663, %v667
  %v669 = vadd.f32 %v668, 1.0
  %v670 = vmul.f32 %v669, %v654
  %vm671 = vweird.f32 %v62
  %v672 = vadd.s32 %v655, 3
  %v673 = vand.u32 %v672, 3
  %vm674 = vcmp.lt.s32.totalorder %v673, 2
  %vm675 = vcmp.eq.s32.totalorder %v673, 0
  %v676 = vxor.u32 %v670, 2147483648
  %v677 = vsel %vm675, %v662, %v676
  %vm678 = vcmp.eq.s32.totalorder %v673, 2
  %v679 = vxor.u32 %v662, 2147483648
  %v680 = vsel %vm678, %v679, %v670
  %v681 = vsel %vm674, %v677, %v680
  %v682 = vsel %vm671, nan, %v681
  %vm683 = vcmask 64512
  %684 = vst.msk [vmem:[%s2] sm:$0xff] %vm683, %v217
  %685 = vst.msk [vmem:[%s2 + $0x8] sm:$0xff] %vm683, %v372
  %686 = vst.msk [vmem:[%s2 + $0x10] sm:$0xff] %vm683, %v527
  %687 = vst.msk [vmem:[%s2 + $0x18] sm:$0xff] %vm683, %v682
  // Predicated region
  $region10: #{tpu_custom_call.1} parent=0 // pred_check
    _
  $region11: #{tpu_custom_call.1} parent=0 // pred_check_branch
    %689 = sbr.rel (0) target = $region13
  $region12: #{tpu_custom_call.1} parent=0 // pred_region
    _
  $region13: #{tpu_custom_call.1} parent=0 // pred_fallthru
    _
  // Predicated region
  $region14: #{tpu_custom_call.1} parent=0 // pred_check
    _
  $region15: #{tpu_custom_call.1} parent=0 // pred_check_branch
    %691 = sbr.rel (0) target = $region17
  $region16: #{tpu_custom_call.1} parent=0 // pred_region
    _
  $region17: #{tpu_custom_call.1} parent=0 // pred_fallthru
    _

</llo_original>
